<compile_context>
chip_gen: v7x
topology: tpu7x:2x2x1
jax: 0.10.0
libtpu: 0.0.40
codegen_flags: <defaults>
</compile_context>

<pallas_src>
import jax
import jax.numpy as jnp
from jax.experimental import pallas as pl
from jax.experimental.pallas import tpu as pltpu

CHANNELS = 64  # the module hardcodes expand(-1, 64, ...), so C must be 64


def gate_kernel(m_ref, r_ref, wm_ref, wr_ref, b_ref, o_ref):
    # m_ref / r_ref / o_ref: (C, TS)   wm_ref / wr_ref: (2, C)   b_ref: (2, 1)
    m = m_ref[...]                                   # native dtype, no upcast
    r = r_ref[...]

    # 1x1 conv over concat([msrb, rrdb], channel) == two tiny matmuls + bias.
    # f32 accumulation on the MXU; the narrow-M compute hides under the DMA
    # stream.  The reduction is over C only (per lane), so garbage lanes in a
    # ragged boundary block stay in lanes that are masked on store.
    logits = (
        jnp.dot(wm_ref[...], m, preferred_element_type=jnp.float32)
        + jnp.dot(wr_ref[...], r, preferred_element_type=jnp.float32)
        + b_ref[...]
    )                                                # (2, TS) f32
    gates = jax.nn.sigmoid(logits).astype(m.dtype)   # only the gates get cast

    # Gate each channel plane; (1, TS) sublane-broadcasts over the C sublanes.
    o_ref[...] = (gates[0:1, :] * m + gates[1:2, :] * r).astype(o_ref.dtype)


def _vmem_capacity_bytes():
    """Per-core VMEM capacity; conservative 64 MiB (v7x) fallback."""
    try:
        cap = getattr(pltpu.get_tpu_info(), "vmem_capacity_bytes", None)
        if cap:
            return int(cap)
    except Exception:
        pass
    return 64 << 20


def _choose_spatial_tile(s, target):
    """Lane tile (multiple of 128) for the spatial axis.

    No external padding is ever done: if the tile does not divide S, the last
    block is ragged and Pallas masks its store.
    """
    if s <= target:
        # One block covering the whole extent, rounded UP to 128 lanes so the
        # output store stays lane-dense (avoids masked vst.msk narrow stores).
        return max(128, ((s + 127) // 128) * 128)
    # Prefer an exact divisor (no ragged tail), but never accept a divisor
    # below ~2048 lanes: tiny tiles make the ~0.35 us/step overhead dominate.
    floor = max(2048, target // 4)
    cand = target
    while cand >= floor:
        if s % cand == 0:
            return cand
        cand -= 128
    return target  # ragged last block, handled by Pallas store masking


def gate_module_pallas(msrb_out, rrdb_out, conv_w, conv_b, *, spatial_tile=None):
    """msrb_out, rrdb_out: (N, C, H, W) with C == 64.
    conv_w: (2, 2*C) or a torch-style (2, 2*C, 1, 1) 1x1-conv weight.
    conv_b: (2,).  Returns (N, C, H, W)."""
    N, C, H, W = msrb_out.shape
    assert C == CHANNELS, "GateModule hardcodes expand(-1, 64, ...)"
    assert rrdb_out.shape == msrb_out.shape

    dtype = msrb_out.dtype
    itemsize = jnp.dtype(dtype).itemsize
    S = H * W

    # --- generation-aware tile / VMEM budget --------------------------------
    cap = _vmem_capacity_bytes()
    budget = (cap * 3) // 4                               # compiler headroom
    if spatial_tile is None:
        # Bigger default tiles on 128-MiB-VMEM parts (v5e/v6e); 8192 on v7x.
        spatial_tile = 16384 if cap >= (96 << 20) else 8192
    target = max(128, (int(spatial_tile) // 128) * 128)
    # 3 streamed arrays (m, r, out) x double buffer + ~8 MiB headroom must fit.
    while target > 128 and 6 * C * target * itemsize + (8 << 20) > budget:
        target -= 128

    ts = _choose_spatial_tile(S, target)

    # v7x megacore: guarantee >= 2 grid steps so both TensorCores get work.
    # Harmless on v5e/v6e (one extra ~0.35 us step at most).
    if N * pl.cdiv(S, ts) < 2 and S > 128:
        ts = min(ts, ((pl.cdiv(S, 2) + 127) // 128) * 128)

    grid = (N, pl.cdiv(S, ts))

    block_bytes = C * ts * itemsize
    vmem_limit = int(min(max(6 * block_bytes + (8 << 20), 16 << 20), budget))

    # --- layout: (N, C, H, W) -> (N, C, S) is a contiguous merge, no transpose
    m = msrb_out.reshape(N, C, S)
    r = rrdb_out.reshape(N, C, S)

    # Split the 1x1 conv weight: first C input channels act on msrb, last C on
    # rrdb (matches the torch.cat order).  Weights are cast to the data dtype
    # so the MXU sees a same-dtype matmul; the bias stays f32 (added to the
    # f32 logits).
    if conv_w.ndim == 4:                     # torch Conv2d weight (2, 2C, 1, 1)
        conv_w = conv_w.reshape(conv_w.shape[0], conv_w.shape[1])
    w_ms = conv_w[:, :C].astype(dtype)       # (2, C)
    w_rr = conv_w[:, C:].astype(dtype)       # (2, C)
    bias = conv_b.reshape(2, 1).astype(jnp.float32)

    data_spec = pl.BlockSpec((None, C, ts), lambda n, s: (n, 0, s))

    out = pl.pallas_call(
        gate_kernel,
        out_shape=jax.ShapeDtypeStruct((N, C, S), dtype),
        grid_spec=pltpu.PrefetchScalarGridSpec(
            num_scalar_prefetch=0,
            grid=grid,
            in_specs=[
                data_spec,                                   # msrb block
                data_spec,                                   # rrdb block
                pl.BlockSpec((2, C), lambda n, s: (0, 0)),   # msrb-half weights
                pl.BlockSpec((2, C), lambda n, s: (0, 0)),   # rrdb-half weights
                pl.BlockSpec((2, 1), lambda n, s: (0, 0)),   # bias
            ],
            out_specs=data_spec,
        ),
        compiler_params=pltpu.CompilerParams(
            dimension_semantics=("parallel", "parallel"),
            vmem_limit_bytes=vmem_limit,
        ),
    )(m, r, w_ms, w_rr, bias)

    return out.reshape(N, C, H, W)


def gate_module_ref(msrb_out, rrdb_out, conv_w, conv_b):
    """Pure-JAX reference mirroring the PyTorch forward."""
    fused = jnp.concatenate([msrb_out, rrdb_out], axis=1)            # (N, 2C, H, W)
    logits = jnp.einsum("nchw,oc->nohw", fused.astype(jnp.float32),
                        conv_w.astype(jnp.float32)) + conv_b[None, :, None, None]
    weights = jax.nn.sigmoid(logits)                                 # (N, 2, H, W)
    w_ms = weights[:, 0:1].astype(msrb_out.dtype)
    w_rr = weights[:, 1:2].astype(msrb_out.dtype)
    return w_ms * msrb_out + w_rr * rrdb_out


if __name__ == "__main__":
    key = jax.random.PRNGKey(0)
    k1, k2, k3, k4 = jax.random.split(key, 4)

    # Deterministic synthetic parameters for Conv2d(2*C, 2, kernel_size=1).
    conv_w = jax.random.normal(k3, (2, 2 * CHANNELS), dtype=jnp.float32) * 0.05
    conv_b = jax.random.normal(k4, (2,), dtype=jnp.float32) * 0.05

    # 1) f32, divisible spatial extent: N=2, S=256 -> grid (2, 1).
    msrb = jax.random.normal(k1, (2, CHANNELS, 16, 16), dtype=jnp.float32)
    rrdb = jax.random.normal(k2, (2, CHANNELS, 16, 16), dtype=jnp.float32)
    out = jax.block_until_ready(gate_module_pallas(msrb, rrdb, conv_w, conv_b))
    ref = gate_module_ref(msrb, rrdb, conv_w, conv_b)
    assert out.shape == msrb.shape
    assert jnp.allclose(out, ref, atol=1e-5, rtol=1e-5)

    # 2) f32, ragged tail + megacore split: N=1, S=324 -> ts=256, grid (1, 2),
    #    last block store-masked (no external pad/slice passes).
    msrb2 = jax.random.normal(k1, (1, CHANNELS, 18, 18), dtype=jnp.float32)
    rrdb2 = jax.random.normal(k2, (1, CHANNELS, 18, 18), dtype=jnp.float32)
    out2 = jax.block_until_ready(gate_module_pallas(msrb2, rrdb2, conv_w, conv_b))
    ref2 = gate_module_ref(msrb2, rrdb2, conv_w, conv_b)
    assert out2.shape == msrb2.shape
    assert jnp.allclose(out2, ref2, atol=1e-5, rtol=1e-5)

    # 3) f32, block wider than S: N=2, S=324 -> ts=384 (> S), grid (2, 1).
    msrb3 = jax.random.normal(k2, (2, CHANNELS, 18, 18), dtype=jnp.float32)
    rrdb3 = jax.random.normal(k1, (2, CHANNELS, 18, 18), dtype=jnp.float32)
    out3 = jax.block_until_ready(gate_module_pallas(msrb3, rrdb3, conv_w, conv_b))
    ref3 = gate_module_ref(msrb3, rrdb3, conv_w, conv_b)
    assert out3.shape == msrb3.shape
    assert jnp.allclose(out3, ref3, atol=1e-5, rtol=1e-5)

    # 4) bf16 path (no full-block f32 upcast): N=1, S=256 -> ts=128, grid (1, 2).
    msrb4 = jax.random.normal(k1, (1, CHANNELS, 16, 16), dtype=jnp.bfloat16)
    rrdb4 = jax.random.normal(k2, (1, CHANNELS, 16, 16), dtype=jnp.bfloat16)
    out4 = jax.block_until_ready(gate_module_pallas(msrb4, rrdb4, conv_w, conv_b))
    ref4 = gate_module_ref(msrb4, rrdb4, conv_w, conv_b)
    assert out4.shape == msrb4.shape
    assert out4.dtype == jnp.bfloat16
    assert jnp.allclose(out4.astype(jnp.float32), ref4.astype(jnp.float32),
                        atol=5e-2, rtol=5e-2)

    print("KERNEL_OK")
</pallas_src>

<mosaic_0001>
module attributes {stable_mosaic.version = 11 : i64} {
  func.func @gate_kernel(%arg0: i32, %arg1: i32, %arg2: memref<1x64x256xf32, #tpu.memory_space<vmem>>, %arg3: memref<1x64x256xf32, #tpu.memory_space<vmem>>, %arg4: memref<2x64xf32, #tpu.memory_space<vmem>>, %arg5: memref<2x64xf32, #tpu.memory_space<vmem>>, %arg6: memref<2x1xf32, #tpu.memory_space<vmem>>, %arg7: memref<1x64x256xf32, #tpu.memory_space<vmem>>) attributes {dimension_semantics = [#tpu.dimension_semantics<parallel>, #tpu.dimension_semantics<parallel>], iteration_bounds = array<i64: 2, 1>, scalar_prefetch = 0 : i64, scratch_operands = 0 : i64, tpu.core_type = #tpu.core_type<tc>, window_params = [{transform_indices = @transform_0, window_bounds = array<i64: 1, 64, 256>}, {transform_indices = @transform_1, window_bounds = array<i64: 1, 64, 256>}, {pipeline_mode = #tpu.pipeline_mode<synchronous>, transform_indices = @transform_2, window_bounds = array<i64: 2, 64>}, {pipeline_mode = #tpu.pipeline_mode<synchronous>, transform_indices = @transform_3, window_bounds = array<i64: 2, 64>}, {pipeline_mode = #tpu.pipeline_mode<synchronous>, transform_indices = @transform_4, window_bounds = array<i64: 2, 1>}, {transform_indices = @transform_5, window_bounds = array<i64: 1, 64, 256>}]} {
    %c0 = arith.constant 0 : index
    %c0_0 = arith.constant 0 : index
    %c0_1 = arith.constant 0 : index
    %0 = vector.load %arg2[%c0, %c0_0, %c0_1] : memref<1x64x256xf32, #tpu.memory_space<vmem>>, vector<1x64x256xf32>
    %1 = vector.shape_cast %0 : vector<1x64x256xf32> to vector<64x256xf32>
    %c0_2 = arith.constant 0 : index
    %c0_3 = arith.constant 0 : index
    %c0_4 = arith.constant 0 : index
    %2 = vector.load %arg3[%c0_2, %c0_3, %c0_4] : memref<1x64x256xf32, #tpu.memory_space<vmem>>, vector<1x64x256xf32>
    %3 = vector.shape_cast %2 : vector<1x64x256xf32> to vector<64x256xf32>
    %c0_5 = arith.constant 0 : index
    %c0_6 = arith.constant 0 : index
    %4 = vector.load %arg4[%c0_5, %c0_6] : memref<2x64xf32, #tpu.memory_space<vmem>>, vector<2x64xf32>
    %cst = arith.constant dense<0.000000e+00> : vector<2x256xf32>
    %5 = tpu.matmul %4, %1, %cst {dimension_numbers = #tpu.dot_dimension_numbers<[1], [0], [0], [1], [0, 0, 1, 1], [], []>} : vector<2x64xf32>, vector<64x256xf32>, vector<2x256xf32> -> vector<2x256xf32>
    %c0_7 = arith.constant 0 : index
    %c0_8 = arith.constant 0 : index
    %6 = vector.load %arg5[%c0_7, %c0_8] : memref<2x64xf32, #tpu.memory_space<vmem>>, vector<2x64xf32>
    %cst_9 = arith.constant dense<0.000000e+00> : vector<2x256xf32>
    %7 = tpu.matmul %6, %3, %cst_9 {dimension_numbers = #tpu.dot_dimension_numbers<[1], [0], [0], [1], [0, 0, 1, 1], [], []>} : vector<2x64xf32>, vector<64x256xf32>, vector<2x256xf32> -> vector<2x256xf32>
    %8 = arith.addf %5, %7 : vector<2x256xf32>
    %c0_10 = arith.constant 0 : index
    %c0_11 = arith.constant 0 : index
    %9 = vector.load %arg6[%c0_10, %c0_11] : memref<2x1xf32, #tpu.memory_space<vmem>>, vector<2x1xf32>
    %10 = vector.broadcast %9 : vector<2x1xf32> to vector<2x256xf32>
    %11 = arith.addf %8, %10 : vector<2x256xf32>
    %12 = arith.negf %11 : vector<2x256xf32>
    %13 = math.exp %12 : vector<2x256xf32>
    %cst_12 = arith.constant 1.000000e+00 : f32
    %14 = vector.broadcast %cst_12 : f32 to vector<2x256xf32>
    %15 = arith.addf %14, %13 : vector<2x256xf32>
    %16 = arith.divf %14, %15 : vector<2x256xf32>
    %17 = vector.extract_strided_slice %16 {offsets = [0, 0], sizes = [1, 256], strides = [1, 1]} : vector<2x256xf32> to vector<1x256xf32>
    %18 = vector.broadcast %17 : vector<1x256xf32> to vector<64x256xf32>
    %19 = arith.mulf %18, %1 : vector<64x256xf32>
    %20 = vector.extract_strided_slice %16 {offsets = [1, 0], sizes = [1, 256], strides = [1, 1]} : vector<2x256xf32> to vector<1x256xf32>
    %21 = vector.broadcast %20 : vector<1x256xf32> to vector<64x256xf32>
    %22 = arith.mulf %21, %3 : vector<64x256xf32>
    %23 = arith.addf %19, %22 : vector<64x256xf32>
    %c0_13 = arith.constant 0 : index
    %c0_14 = arith.constant 0 : index
    %c0_15 = arith.constant 0 : index
    %24 = vector.load %arg7[%c0_13, %c0_14, %c0_15] : memref<1x64x256xf32, #tpu.memory_space<vmem>>, vector<1x64x256xf32>
    %25 = vector.shape_cast %24 : vector<1x64x256xf32> to vector<64x256xf32>
    %26 = vector.shape_cast %23 : vector<64x256xf32> to vector<1x64x256xf32>
    tpu.vector_store %arg7[%c0_13, %c0_14, %c0_15], %26 {strides = array<i32>} : memref<1x64x256xf32, #tpu.memory_space<vmem>>, vector<1x64x256xf32>,
    return
  }
  func.func @transform_0(%arg0: i32, %arg1: i32) -> (i32, i32, i32) {
    %c0_i32 = arith.constant 0 : i32
    %c0_i32_0 = arith.constant 0 : i32
    return %arg0, %c0_i32, %arg1 : i32, i32, i32
  }
  func.func @transform_1(%arg0: i32, %arg1: i32) -> (i32, i32, i32) {
    %c0_i32 = arith.constant 0 : i32
    %c0_i32_0 = arith.constant 0 : i32
    return %arg0, %c0_i32, %arg1 : i32, i32, i32
  }
  func.func @transform_2(%arg0: i32, %arg1: i32) -> (i32, i32) {
    %c0_i32 = arith.constant 0 : i32
    %c0_i32_0 = arith.constant 0 : i32
    %c0_i32_1 = arith.constant 0 : i32
    return %c0_i32, %c0_i32_0 : i32, i32
  }
  func.func @transform_3(%arg0: i32, %arg1: i32) -> (i32, i32) {
    %c0_i32 = arith.constant 0 : i32
    %c0_i32_0 = arith.constant 0 : i32
    %c0_i32_1 = arith.constant 0 : i32
    return %c0_i32, %c0_i32_0 : i32, i32
  }
  func.func @transform_4(%arg0: i32, %arg1: i32) -> (i32, i32) {
    %c0_i32 = arith.constant 0 : i32
    %c0_i32_0 = arith.constant 0 : i32
    %c0_i32_1 = arith.constant 0 : i32
    return %c0_i32, %c0_i32_0 : i32, i32
  }
  func.func @transform_5(%arg0: i32, %arg1: i32) -> (i32, i32, i32) {
    %c0_i32 = arith.constant 0 : i32
    %c0_i32_0 = arith.constant 0 : i32
    return %arg0, %c0_i32, %arg1 : i32, i32, i32
  }
}

</mosaic_0001>

<llo_original>
// kernel: tpu_custom_call.1
$region0: #{tpu_custom_call.1}
  #allocation0 [shape = 'u32[]', space=smem, size = 0x4, offset = 0x4, fixed_abs, tag = 'smem constant byte address 0x4 - core index']
  #allocation1 [shape = 'u32[144,128]{1,0:T(1,128)}', space=vmem, size = 0x12000, scoped, tag = 'internal scratch']
  %s0 = inlined_call_operand.hbm [shape: f32[2,64,256], index: 0, kind: input, shape index: {}]
  %s1 = inlined_call_operand.hbm [shape: f32[2,64,256], index: 1, kind: input, shape index: {}]
  %s2 = inlined_call_operand.vmem [shape: f32[2,64], index: 2, kind: input, shape index: {}]
  %s3 = inlined_call_operand.vmem [shape: f32[2,64], index: 3, kind: input, shape index: {}]
  %s4 = inlined_call_operand.vmem [shape: f32[2,1], index: 4, kind: input, shape index: {}]
  %s5 = inlined_call_operand.hbm [shape: f32[2,64,256], index: 5, kind: output, shape index: {}]
  %s6 = sld [smem:[#allocation0]]
  $region61: #{tpu_custom_call.1} parent=0
    _
  %s8 = ssub.s32 1, %s6
  %s9 = scalar_select 0, %s8, %s6
  $region1: #{tpu_custom_call.1} parent=0
    #allocation2 [shape = 'u8[131072]{0}', space=vmem, size = 0x20000, scoped, tag = 'input window, operand 0']
    #allocation3 [shape = 's32[2]{0}', space=sflag, size = 0x8, scoped, tag = 'scoped memory for tpu_custom_call.1']
    #allocation4 [shape = 's32[2]{0}', space=sflag, size = 0x8, scoped, tag = 'scoped memory for tpu_custom_call.1']
    #allocation5 [shape = 'u8[131072]{0}', space=vmem, size = 0x20000, scoped, tag = 'input window, operand 1']
    #allocation6 [shape = 's32[2]{0}', space=sflag, size = 0x8, scoped, tag = 'scoped memory for tpu_custom_call.1']
    #allocation7 [shape = 'u8[131072]{0}', space=vmem, size = 0x20000, scoped, tag = 'output window, operand 0']
    %10 = vsyncpa [#allocation3], 0
    %s11 = scalar_lea.sflag [#allocation3], 1
    %12 = vsyncpa %s11, 0
    %13 = vsyncpa [#allocation6], 0
    %s14 = scalar_lea.sflag [#allocation6], 1
    %15 = vsyncpa %s14, 0
    %16 = vsyncpa [#allocation4], 0
    %s17 = scalar_lea.sflag [#allocation4], 1
    %18 = vsyncpa %s17, 0
    loop: start=0, step=1, limit=4
    $region2: #{tpu_custom_call.1} parent=1 // loop_pre_header
      _
    $region3: #{tpu_custom_call.1} parent=1 // loop_header
      %s20 = sphi 0, %s24
      %p21 = scmp.ge.s32.totalorder %s20, 4
      %s27 = sphi 0, %s39
      %s28 = sphi 0, %s35
      %s29 = sphi 0, %s27
      %s30 = sphi 0, %s28
      %s31 = sphi 0, %s29
      %s32 = sphi 0, %s30
      %s44 = sphi 0, %s46
      %s47 = sphi 0, %s44
      %s48 = sphi 0, %s47
      %s64 = sphi 0, %s48
      %s72 = sphi 0, %s74
      %s75 = sphi 0, %s72
      %s76 = sphi 0, %s75
      %s92 = sphi 0, %s76
      %s96 = sphi 0, %s96
      %s98 = sphi 0, %s96
      %s99 = sphi 0, %s98
      %s113 = sphi 0, %s99
      %s117 = sphi 0, %s117
      %s119 = sphi 0, %s117
      %s120 = sphi 0, %s119
      %s134 = sphi 0, %s120
      %s138 = sphi 0, %s138
      %s140 = sphi 0, %s138
      %s141 = sphi 0, %s140
      %s155 = sphi 0, %s141
      %s163 = sphi 0, %s165
      %s166 = sphi 0, %s163
      %s167 = sphi 0, %s166
      %s183 = sphi 0, %s167
    $region4: #{tpu_custom_call.1} parent=1 // loop_header_branch
      %23 = sbr.rel (%p21) target = $region8
    $region5: #{tpu_custom_call.1} parent=1 // loop_body
      %s25 = ssub.s32 %s20, 1
      %s26 = ssub.s32 %s20, 2
      %s33 = sadd.s32 1, %s28
      %p34 = scmp.ge.s32.totalorder %s33, 1
      %s35 = scalar_select %p34, 0, %s33
      %s36 = sadd.s32 1, %s27
      %s37 = scalar_select %p34, %s36, %s27
      %p38 = scmp.ge.s32.totalorder %s37, 2
      %s39 = scalar_select %p38, 0, %s37
      %s40 = ssub.s32 %s27, %s39
      %s41 = ssub.s32 %s28, %s35
      %s42 = sor.u32 %s40, %s41
      %p43 = scmp.eq.s32.totalorder %s42, 0
      %s45 = sadd.s32 %s44, 1
      %s46 = scalar_select %p43, %s44, %s45
      %p49 = pneg %p43
      %p50 = scmp.eq.s32.totalorder %s20, 1
      %p51 = por %p49, %p50
      %p52 = scmp.ne.s32.totalorder %s44, %s47
      %p53 = scmp.eq.s32.totalorder %s20, 0
      %p54 = por %p52, %p53
      %p55 = scmp.ne.s32.totalorder %s44, %s47
      %p56 = scmp.eq.s32.totalorder %s25, 1
      %p57 = por %p55, %p56
      %p58 = scmp.ne.s32.totalorder %s47, %s48
      %p59 = scmp.eq.s32.totalorder %s25, 0
      %p60 = por %p58, %p59
      %p61 = scmp.ne.s32.totalorder %s47, %s48
      %p62 = scmp.eq.s32.totalorder %s26, 1
      %p63 = por %p61, %p62
      %p65 = scmp.ne.s32.totalorder %s48, %s64
      %p66 = scmp.eq.s32.totalorder %s26, 0
      %p67 = por %p65, %p66
      %s68 = ssub.s32 %s27, %s39
      %s69 = ssub.s32 %s28, %s35
      %s70 = sor.u32 %s68, %s69
      %p71 = scmp.eq.s32.totalorder %s70, 0
      %s73 = sadd.s32 %s72, 1
      %s74 = scalar_select %p71, %s72, %s73
      %p77 = pneg %p71
      %p78 = scmp.eq.s32.totalorder %s20, 1
      %p79 = por %p77, %p78
      %p80 = scmp.ne.s32.totalorder %s72, %s75
      %p81 = scmp.eq.s32.totalorder %s20, 0
      %p82 = por %p80, %p81
      %p83 = scmp.ne.s32.totalorder %s72, %s75
      %p84 = scmp.eq.s32.totalorder %s25, 1
      %p85 = por %p83, %p84
      %p86 = scmp.ne.s32.totalorder %s75, %s76
      %p87 = scmp.eq.s32.totalorder %s25, 0
      %p88 = por %p86, %p87
      %p89 = scmp.ne.s32.totalorder %s75, %s76
      %p90 = scmp.eq.s32.totalorder %s26, 1
      %p91 = por %p89, %p90
      %p93 = scmp.ne.s32.totalorder %s76, %s92
      %p94 = scmp.eq.s32.totalorder %s26, 0
      %p95 = por %p93, %p94
      %s97 = sadd.s32 %s96, 1
      %p100 = scmp.eq.s32.totalorder %s20, 1
      %p101 = scmp.ne.s32.totalorder %s96, %s98
      %p102 = scmp.eq.s32.totalorder %s20, 0
      %p103 = por %p101, %p102
      %p104 = scmp.ne.s32.totalorder %s96, %s98
      %p105 = scmp.eq.s32.totalorder %s25, 1
      %p106 = por %p104, %p105
      %p107 = scmp.ne.s32.totalorder %s98, %s99
      %p108 = scmp.eq.s32.totalorder %s25, 0
      %p109 = por %p107, %p108
      %p110 = scmp.ne.s32.totalorder %s98, %s99
      %p111 = scmp.eq.s32.totalorder %s26, 1
      %p112 = por %p110, %p111
      %p114 = scmp.ne.s32.totalorder %s99, %s113
      %p115 = scmp.eq.s32.totalorder %s26, 0
      %p116 = por %p114, %p115
      %s118 = sadd.s32 %s117, 1
      %p121 = scmp.eq.s32.totalorder %s20, 1
      %p122 = scmp.ne.s32.totalorder %s117, %s119
      %p123 = scmp.eq.s32.totalorder %s20, 0
      %p124 = por %p122, %p123
      %p125 = scmp.ne.s32.totalorder %s117, %s119
      %p126 = scmp.eq.s32.totalorder %s25, 1
      %p127 = por %p125, %p126
      %p128 = scmp.ne.s32.totalorder %s119, %s120
      %p129 = scmp.eq.s32.totalorder %s25, 0
      %p130 = por %p128, %p129
      %p131 = scmp.ne.s32.totalorder %s119, %s120
      %p132 = scmp.eq.s32.totalorder %s26, 1
      %p133 = por %p131, %p132
      %p135 = scmp.ne.s32.totalorder %s120, %s134
      %p136 = scmp.eq.s32.totalorder %s26, 0
      %p137 = por %p135, %p136
      %s139 = sadd.s32 %s138, 1
      %p142 = scmp.eq.s32.totalorder %s20, 1
      %p143 = scmp.ne.s32.totalorder %s138, %s140
      %p144 = scmp.eq.s32.totalorder %s20, 0
      %p145 = por %p143, %p144
      %p146 = scmp.ne.s32.totalorder %s138, %s140
      %p147 = scmp.eq.s32.totalorder %s25, 1
      %p148 = por %p146, %p147
      %p149 = scmp.ne.s32.totalorder %s140, %s141
      %p150 = scmp.eq.s32.totalorder %s25, 0
      %p151 = por %p149, %p150
      %p152 = scmp.ne.s32.totalorder %s140, %s141
      %p153 = scmp.eq.s32.totalorder %s26, 1
      %p154 = por %p152, %p153
      %p156 = scmp.ne.s32.totalorder %s141, %s155
      %p157 = scmp.eq.s32.totalorder %s26, 0
      %p158 = por %p156, %p157
      %s159 = ssub.s32 %s27, %s39
      %s160 = ssub.s32 %s28, %s35
      %s161 = sor.u32 %s159, %s160
      %p162 = scmp.eq.s32.totalorder %s161, 0
      %s164 = sadd.s32 %s163, 1
      %s165 = scalar_select %p162, %s163, %s164
      %p168 = pneg %p162
      %p169 = scmp.eq.s32.totalorder %s20, 1
      %p170 = por %p168, %p169
      %p171 = scmp.ne.s32.totalorder %s163, %s166
      %p172 = scmp.eq.s32.totalorder %s20, 0
      %p173 = por %p171, %p172
      %p174 = scmp.ne.s32.totalorder %s163, %s166
      %p175 = scmp.eq.s32.totalorder %s25, 1
      %p176 = por %p174, %p175
      %p177 = scmp.ne.s32.totalorder %s166, %s167
      %p178 = scmp.eq.s32.totalorder %s25, 0
      %p179 = por %p177, %p178
      %p180 = scmp.ne.s32.totalorder %s166, %s167
      %p181 = scmp.eq.s32.totalorder %s26, 1
      %p182 = por %p180, %p181
      %p184 = scmp.ne.s32.totalorder %s167, %s183
      %p185 = scmp.eq.s32.totalorder %s26, 0
      %p186 = por %p184, %p185
      %p187 = scmp.le.s32.totalorder 1, %s20
      %p188 = scmp.lt.s32.totalorder %s20, 3
      %p189 = pnand %p187, %p188
      %p190 = pneg %p189
      // Predicated region
      $region9: #{tpu_custom_call.1} parent=5 // pred_check
        _
      $region10: #{tpu_custom_call.1} parent=5 // pred_check_branch
        %192 = sbr.rel (%p189) target = $region12
      $region11: #{tpu_custom_call.1} parent=5 // pred_region
        %s193 = ssub.s32 %s20, 1
        // Predicated region
        $region13: #{tpu_custom_call.1} parent=11 // pred_check
          %p194 = pneg %p109
        $region14: #{tpu_custom_call.1} parent=11 // pred_check_branch
          %196 = sbr.rel (%p194) target = $region16
        $region15: #{tpu_custom_call.1} parent=11 // pred_region
          _
        $region16: #{tpu_custom_call.1} parent=11 // pred_fallthru
          _
        // Predicated region
        $region17: #{tpu_custom_call.1} parent=11 // pred_check
          %p197 = pneg %p130
        $region18: #{tpu_custom_call.1} parent=11 // pred_check_branch
          %199 = sbr.rel (%p197) target = $region20
        $region19: #{tpu_custom_call.1} parent=11 // pred_region
          _
        $region20: #{tpu_custom_call.1} parent=11 // pred_fallthru
          _
        // Predicated region
        $region21: #{tpu_custom_call.1} parent=11 // pred_check
          %p200 = pneg %p151
        $region22: #{tpu_custom_call.1} parent=11 // pred_check_branch
          %202 = sbr.rel (%p200) target = $region24
        $region23: #{tpu_custom_call.1} parent=11 // pred_region
          _
        $region24: #{tpu_custom_call.1} parent=11 // pred_fallthru
          _
      $region12: #{tpu_custom_call.1} parent=5 // pred_fallthru
        _
      %p203 = scmp.lt.s32.totalorder %s20, 2
      // Predicated region
      $region25: #{tpu_custom_call.1} parent=5 // pred_check
        %p204 = pneg %p203
      $region26: #{tpu_custom_call.1} parent=5 // pred_check_branch
        %206 = sbr.rel (%p204) target = $region28
      $region27: #{tpu_custom_call.1} parent=5 // pred_region
        // Predicated region
        $region29: #{tpu_custom_call.1} parent=27 // pred_check
          %p207 = pneg %p54
        $region30: #{tpu_custom_call.1} parent=27 // pred_check_branch
          %209 = sbr.rel (%p207) target = $region32
        $region31: #{tpu_custom_call.1} parent=27 // pred_region
          %s210 = sand.u32 %s44, 1
          %s211 = scalar_lea.sflag [#allocation3], %s210
          %s212 = sand.u32 %s44, 1
          %s213 = smul.addr %s212, 128
          %s214 = scalar_lea.vmem [#allocation2], %s213
          %s215 = smul.u32 2, %s28
          %s217 = ssub.s32 2048, 2048
          %218 = vsyncadd %s211, %s217
          %s219 = smul.addr %s27, 16
          %s220 = sadd.s32 %s215, %s219
          %s221 = smul.addr %s220, 128
          %s222 = scalar_lea.hbm %s0, %s221
          %s223 = sshll.u32 %s214, 4
          %s224 = int_to_ptr.vmem [resolvable:$true] %s223
          %229 = dma.hbm_to_vmem [thread:$0]  %s222, 2048, %s224, %s211, 256, 256, 16
        $region32: #{tpu_custom_call.1} parent=27 // pred_fallthru
          _
        // Predicated region
        $region33: #{tpu_custom_call.1} parent=27 // pred_check
          %p230 = pneg %p82
        $region34: #{tpu_custom_call.1} parent=27 // pred_check_branch
          %232 = sbr.rel (%p230) target = $region36
        $region35: #{tpu_custom_call.1} parent=27 // pred_region
          %s233 = sand.u32 %s72, 1
          %s234 = scalar_lea.sflag [#allocation6], %s233
          %s235 = sand.u32 %s72, 1
          %s236 = smul.addr %s235, 128
          %s237 = scalar_lea.vmem [#allocation5], %s236
          %s238 = smul.u32 2, %s28
          %s240 = ssub.s32 2048, 2048
          %241 = vsyncadd %s234, %s240
          %s242 = smul.addr %s27, 16
          %s243 = sadd.s32 %s238, %s242
          %s244 = smul.addr %s243, 128
          %s245 = scalar_lea.hbm %s1, %s244
          %s246 = sshll.u32 %s237, 4
          %s247 = int_to_ptr.vmem [resolvable:$true] %s246
          %252 = dma.hbm_to_vmem [thread:$0]  %s245, 2048, %s247, %s234, 256, 256, 16
        $region36: #{tpu_custom_call.1} parent=27 // pred_fallthru
          _
      $region28: #{tpu_custom_call.1} parent=5 // pred_fallthru
        _
      %p253 = scmp.le.s32.totalorder 1, %s20
      %p254 = scmp.lt.s32.totalorder %s20, 3
      %p255 = pnand %p253, %p254
      %p256 = pneg %p255
      // Predicated region
      $region37: #{tpu_custom_call.1} parent=5 // pred_check
        _
      $region38: #{tpu_custom_call.1} parent=5 // pred_check_branch
        %258 = sbr.rel (%p255) target = $region40
      $region39: #{tpu_custom_call.1} parent=5 // pred_region
        %s259 = ssub.s32 %s20, 1
        %s260 = sand.u32 %s47, 1
        %s261 = scalar_lea.sflag [#allocation3], %s260
        %s262 = sand.u32 %s47, 1
        %s263 = smul.addr %s262, 128
        %s264 = scalar_lea.vmem [#allocation2], %s263
        // Predicated region
        $region41: #{tpu_custom_call.1} parent=39 // pred_check
          %p265 = pneg %p60
        $region42: #{tpu_custom_call.1} parent=39 // pred_check_branch
          %267 = sbr.rel (%p265) target = $region44
        $region43: #{tpu_custom_call.1} parent=39 // pred_region
          %268 = dma.done %s261, 2048
        $region44: #{tpu_custom_call.1} parent=39 // pred_fallthru
          _
        %s269 = sand.u32 %s75, 1
        %s270 = scalar_lea.sflag [#allocation6], %s269
        %s271 = sand.u32 %s75, 1
        %s272 = smul.addr %s271, 128
        %s273 = scalar_lea.vmem [#allocation5], %s272
        // Predicated region
        $region45: #{tpu_custom_call.1} parent=39 // pred_check
          %p274 = pneg %p88
        $region46: #{tpu_custom_call.1} parent=39 // pred_check_branch
          %276 = sbr.rel (%p274) target = $region48
        $region47: #{tpu_custom_call.1} parent=39 // pred_region
          %277 = dma.done %s270, 2048
        $region48: #{tpu_custom_call.1} parent=39 // pred_fallthru
          _
        %s278 = sand.u32 %s47, 1
        %s279 = scalar_lea.sflag [#allocation3], %s278
        %s280 = sand.u32 %s47, 1
        %s281 = smul.addr %s280, 128
        %s282 = scalar_lea.vmem [#allocation2], %s281
        %p283 = pneg %p60
        %p284 = pneg %p57
        %s285 = sand.u32 %s75, 1
        %s286 = scalar_lea.sflag [#allocation6], %s285
        %s287 = sand.u32 %s75, 1
        %s288 = smul.addr %s287, 128
        %s289 = scalar_lea.vmem [#allocation5], %s288
        %p290 = pneg %p88
        %p291 = pneg %p85
        %p292 = pneg %p109
        %p293 = pneg %p106
        %p294 = pneg %p130
        %p295 = pneg %p127
        %p296 = pneg %p151
        %p297 = pneg %p148
        %p298 = pneg %p179
        %p299 = pneg %p176
        %s300 = sand.u32 %s166, 1
        %s301 = scalar_lea.sflag [#allocation4], %s300
        %s302 = sand.u32 %s166, 1
        %s303 = smul.addr %s302, 128
        %s304 = scalar_lea.vmem [#allocation7], %s303
        %s305 = smul.u32 2, %s30
        %s306 = smul.u32 2, %s30
        %s307 = smul.u32 2, %s30
        %v308 = vld [vmem:[%s264] sm:$0xff]
        %v309 = vld [vmem:[%s264 + $0x8] sm:$0xff]
        %v310 = vld [vmem:[%s264 + $0x10] sm:$0xff]
        %v311 = vld [vmem:[%s264 + $0x18] sm:$0xff]
        %v312 = vld [vmem:[%s264 + $0x20] sm:$0xff]
        %v313 = vld [vmem:[%s264 + $0x28] sm:$0xff]
        %v314 = vld [vmem:[%s264 + $0x30] sm:$0xff]
        %v315 = vld [vmem:[%s264 + $0x38] sm:$0xff]
        %v316 = vld [vmem:[%s264 + $0x40] sm:$0xff]
        %v317 = vld [vmem:[%s264 + $0x48] sm:$0xff]
        %v318 = vld [vmem:[%s264 + $0x50] sm:$0xff]
        %v319 = vld [vmem:[%s264 + $0x58] sm:$0xff]
        %v320 = vld [vmem:[%s264 + $0x60] sm:$0xff]
        %v321 = vld [vmem:[%s264 + $0x68] sm:$0xff]
        %v322 = vld [vmem:[%s264 + $0x70] sm:$0xff]
        %v323 = vld [vmem:[%s264 + $0x78] sm:$0xff]
        %v324 = vld [vmem:[%s273] sm:$0xff]
        %v325 = vld [vmem:[%s273 + $0x8] sm:$0xff]
        %v326 = vld [vmem:[%s273 + $0x10] sm:$0xff]
        %v327 = vld [vmem:[%s273 + $0x18] sm:$0xff]
        %v328 = vld [vmem:[%s273 + $0x20] sm:$0xff]
        %v329 = vld [vmem:[%s273 + $0x28] sm:$0xff]
        %v330 = vld [vmem:[%s273 + $0x30] sm:$0xff]
        %v331 = vld [vmem:[%s273 + $0x38] sm:$0xff]
        %v332 = vld [vmem:[%s273 + $0x40] sm:$0xff]
        %v333 = vld [vmem:[%s273 + $0x48] sm:$0xff]
        %v334 = vld [vmem:[%s273 + $0x50] sm:$0xff]
        %v335 = vld [vmem:[%s273 + $0x58] sm:$0xff]
        %v336 = vld [vmem:[%s273 + $0x60] sm:$0xff]
        %v337 = vld [vmem:[%s273 + $0x68] sm:$0xff]
        %v338 = vld [vmem:[%s273 + $0x70] sm:$0xff]
        %v339 = vld [vmem:[%s273 + $0x78] sm:$0xff]
        %v340 = vld [vmem:[%s2] sm:$0x3]
        %v341 = vld [vmem:[%s3] sm:$0x3]
        %vm342 = vcmask 523264
        %v344 = vsel %vm342, %v341, 0
        %346 = vmatprep.subr.mxu0 %v325
        %347 = vmatpush1.msra.mxu0 %v324
        %348 = vmatprep.subr.mxu0 %v327
        %349 = vmatpush1.msra.mxu0 %v326
        %350 = vmatprep.subr.mxu0 %v329
        %351 = vmatpush1.msra.mxu0 %v328
        %352 = vmatprep.subr.mxu0 %v331
        %353 = vmatpush1.msra.mxu0 %v330
        %354 = vmatprep.subr.mxu0 %v333
        %355 = vmatpush1.msra.mxu0 %v332
        %356 = vmatprep.subr.mxu0 %v335
        %357 = vmatpush1.msra.mxu0 %v334
        %358 = vmatprep.subr.mxu0 %v337
        %359 = vmatpush1.msra.mxu0 %v336
        %360 = vmatprep.subr.mxu0 %v339
        %361 = vmatpush1.msra.mxu0 %v338
        %362 = vmatprep.subr.mxu0 0.0
        %363 = vmatpush1.msra.mxu0 0.0
        %364 = vmatprep.subr.mxu0 0.0
        %365 = vmatpush1.msra.mxu0 0.0
        %366 = vmatprep.subr.mxu0 0.0
        %367 = vmatpush1.msra.mxu0 0.0
        %368 = vmatprep.subr.mxu0 0.0
        %369 = vmatpush1.msra.mxu0 0.0
        %370 = vmatprep.subr.mxu0 0.0
        %371 = vmatpush1.msra.mxu0 0.0
        %372 = vmatprep.subr.mxu0 0.0
        %373 = vmatpush1.msra.mxu0 0.0
        %374 = vmatprep.subr.mxu0 0.0
        %375 = vmatpush1.msra.mxu0 0.0
        %376 = vmatprep.subr.mxu0 0.0
        %377 = vmatpush1.msra.mxu0 0.0
        %378 = vmatprep.subr.mxu0 0.0
        %379 = vmatpush1.msra.mxu0 0.0
        %380 = vmatprep.subr.mxu0 0.0
        %381 = vmatpush1.msra.mxu0 0.0
        %382 = vmatprep.subr.mxu0 0.0
        %383 = vmatpush1.msra.mxu0 0.0
        %384 = vmatprep.subr.mxu0 0.0
        %385 = vmatpush1.msra.mxu0 0.0
        %386 = vmatprep.subr.mxu0 0.0
        %387 = vmatpush1.msra.mxu0 0.0
        %388 = vmatprep.subr.mxu0 0.0
        %389 = vmatpush1.msra.mxu0 0.0
        %390 = vmatprep.subr.mxu0 0.0
        %391 = vmatpush1.msra.mxu0 0.0
        %392 = vmatprep.subr.mxu0 0.0
        %393 = vmatpush1.msra.mxu0 0.0
        %394 = vmatprep.subr.mxu0 0.0
        %395 = vmatpush1.msra.mxu0 0.0
        %396 = vmatprep.subr.mxu0 0.0
        %397 = vmatpush1.msra.mxu0 0.0
        %398 = vmatprep.subr.mxu0 0.0
        %399 = vmatpush1.msra.mxu0 0.0
        %400 = vmatprep.subr.mxu0 0.0
        %401 = vmatpush1.msra.mxu0 0.0
        %402 = vmatprep.subr.mxu0 0.0
        %403 = vmatpush1.msra.mxu0 0.0
        %404 = vmatprep.subr.mxu0 0.0
        %405 = vmatpush1.msra.mxu0 0.0
        %406 = vmatprep.subr.mxu0 0.0
        %407 = vmatpush1.msra.mxu0 0.0
        %408 = vmatprep.subr.mxu0 0.0
        %409 = vmatpush1.msra.mxu0 0.0
        %410 = vmatprep.mubr.f32.mxu0 0.0
        %411 = vmatmul.mubr.f32.gmra.mrb[0].mxu0 %v344
        %v412 = vpop.f32.mrb[0].mxu0
        %v413 = vadd.f32 0.0, %v412
        %v414 = vpop.f32.mrb[0].mxu0
        %v415 = vadd.f32 0.0, %v414
        %416 = vdwg.mxu0
        %v418 = vsel %vm342, %v340, 0
        %420 = vmatprep.subr.mxu0 %v309
        %421 = vmatpush1.msra.mxu0 %v308
        %422 = vmatprep.subr.mxu0 %v311
        %423 = vmatpush1.msra.mxu0 %v310
        %424 = vmatprep.subr.mxu0 %v313
        %425 = vmatpush1.msra.mxu0 %v312
        %426 = vmatprep.subr.mxu0 %v315
        %427 = vmatpush1.msra.mxu0 %v314
        %428 = vmatprep.subr.mxu0 %v317
        %429 = vmatpush1.msra.mxu0 %v316
        %430 = vmatprep.subr.mxu0 %v319
        %431 = vmatpush1.msra.mxu0 %v318
        %432 = vmatprep.subr.mxu0 %v321
        %433 = vmatpush1.msra.mxu0 %v320
        %434 = vmatprep.subr.mxu0 %v323
        %435 = vmatpush1.msra.mxu0 %v322
        %436 = vmatprep.subr.mxu0 0.0
        %437 = vmatpush1.msra.mxu0 0.0
        %438 = vmatprep.subr.mxu0 0.0
        %439 = vmatpush1.msra.mxu0 0.0
        %440 = vmatprep.subr.mxu0 0.0
        %441 = vmatpush1.msra.mxu0 0.0
        %442 = vmatprep.subr.mxu0 0.0
        %443 = vmatpush1.msra.mxu0 0.0
        %444 = vmatprep.subr.mxu0 0.0
        %445 = vmatpush1.msra.mxu0 0.0
        %446 = vmatprep.subr.mxu0 0.0
        %447 = vmatpush1.msra.mxu0 0.0
        %448 = vmatprep.subr.mxu0 0.0
        %449 = vmatpush1.msra.mxu0 0.0
        %450 = vmatprep.subr.mxu0 0.0
        %451 = vmatpush1.msra.mxu0 0.0
        %452 = vmatprep.subr.mxu0 0.0
        %453 = vmatpush1.msra.mxu0 0.0
        %454 = vmatprep.subr.mxu0 0.0
        %455 = vmatpush1.msra.mxu0 0.0
        %456 = vmatprep.subr.mxu0 0.0
        %457 = vmatpush1.msra.mxu0 0.0
        %458 = vmatprep.subr.mxu0 0.0
        %459 = vmatpush1.msra.mxu0 0.0
        %460 = vmatprep.subr.mxu0 0.0
        %461 = vmatpush1.msra.mxu0 0.0
        %462 = vmatprep.subr.mxu0 0.0
        %463 = vmatpush1.msra.mxu0 0.0
        %464 = vmatprep.subr.mxu0 0.0
        %465 = vmatpush1.msra.mxu0 0.0
        %466 = vmatprep.subr.mxu0 0.0
        %467 = vmatpush1.msra.mxu0 0.0
        %468 = vmatprep.subr.mxu0 0.0
        %469 = vmatpush1.msra.mxu0 0.0
        %470 = vmatprep.subr.mxu0 0.0
        %471 = vmatpush1.msra.mxu0 0.0
        %472 = vmatprep.subr.mxu0 0.0
        %473 = vmatpush1.msra.mxu0 0.0
        %474 = vmatprep.subr.mxu0 0.0
        %475 = vmatpush1.msra.mxu0 0.0
        %476 = vmatprep.subr.mxu0 0.0
        %477 = vmatpush1.msra.mxu0 0.0
        %478 = vmatprep.subr.mxu0 0.0
        %479 = vmatpush1.msra.mxu0 0.0
        %480 = vmatprep.subr.mxu0 0.0
        %481 = vmatpush1.msra.mxu0 0.0
        %482 = vmatprep.subr.mxu0 0.0
        %483 = vmatpush1.msra.mxu0 0.0
        %484 = vmatprep.mubr.f32.mxu0 0.0
        %485 = vmatmul.mubr.f32.gmra.mrb[0].mxu0 %v418
        %v486 = vpop.f32.mrb[0].mxu0
        %v487 = vadd.f32 %v413, %v486
        %v488 = vpop.f32.mrb[0].mxu0
        %v489 = vadd.f32 %v415, %v488
        %490 = vdwg.mxu0
        %v491 = vld [vmem:[%s4] sm:$0x3]
        %493 = vset.pattern.permute.xlu0 0
        %494 = vperm.xlu0 %493, %v491
        %v495 = vpop.permute.xlu0 %494
        %v497 = vadd.f32 %v487, %v495
        %v498 = vadd.f32 %v489, %v495
        %v499 = vxor.u32 %v497, 2147483648
        %v500 = vxor.u32 %v498, 2147483648
        %v501 = vmul.f32 %v499, 1.442695
        %v502 = vpow.pop %v501
        %v503 = vmul.f32 %v500, 1.442695
        %v504 = vpow.pop %v503
        %v505 = vadd.f32 %v502, 1.0
        %v506 = vadd.f32 %v504, 1.0
        %v507 = vrcp.pop %v505
        %v508 = vmul.f32 1.0, %v507
        %v509 = vrcp.pop %v506
        %v510 = vmul.f32 1.0, %v509
        %v511 = vlaneseq
        %v512 = vshrl.u32 %v511, 7
        %v513 = vsub.s32 0, %v512
        %v514 = vrot.slane %v508, %v513
        %v515 = vlaneseq
        %v516 = vshrl.u32 %v515, 7
        %v517 = vsub.s32 0, %v516
        %v518 = vrot.slane %v510, %v517
        %v519 = vmul.f32 %v514, %v308
        %v520 = vmul.f32 %v518, %v309
        %v521 = vmul.f32 %v514, %v310
        %v522 = vmul.f32 %v518, %v311
        %v523 = vmul.f32 %v514, %v312
        %v524 = vmul.f32 %v518, %v313
        %v525 = vmul.f32 %v514, %v314
        %v526 = vmul.f32 %v518, %v315
        %v527 = vmul.f32 %v514, %v316
        %v528 = vmul.f32 %v518, %v317
        %v529 = vmul.f32 %v514, %v318
        %v530 = vmul.f32 %v518, %v319
        %v531 = vmul.f32 %v514, %v320
        %v532 = vmul.f32 %v518, %v321
        %v533 = vmul.f32 %v514, %v322
        %v534 = vmul.f32 %v518, %v323
        %v535 = vlaneseq
        %v536 = vshrl.u32 %v535, 7
        %v537 = vsub.s32 1, %v536
        %v538 = vrot.slane %v508, %v537
        %v539 = vlaneseq
        %v540 = vshrl.u32 %v539, 7
        %v541 = vsub.s32 1, %v540
        %v542 = vrot.slane %v510, %v541
        %v543 = vmul.f32 %v538, %v324
        %v544 = vmul.f32 %v542, %v325
        %v545 = vmul.f32 %v538, %v326
        %v546 = vmul.f32 %v542, %v327
        %v547 = vmul.f32 %v538, %v328
        %v548 = vmul.f32 %v542, %v329
        %v549 = vmul.f32 %v538, %v330
        %v550 = vmul.f32 %v542, %v331
        %v551 = vmul.f32 %v538, %v332
        %v552 = vmul.f32 %v542, %v333
        %v553 = vmul.f32 %v538, %v334
        %v554 = vmul.f32 %v542, %v335
        %v555 = vmul.f32 %v538, %v336
        %v556 = vmul.f32 %v542, %v337
        %v557 = vmul.f32 %v538, %v338
        %v558 = vmul.f32 %v542, %v339
        %v559 = vadd.f32 %v519, %v543
        %v560 = vadd.f32 %v520, %v544
        %v561 = vadd.f32 %v521, %v545
        %v562 = vadd.f32 %v522, %v546
        %v563 = vadd.f32 %v523, %v547
        %v564 = vadd.f32 %v524, %v548
        %v565 = vadd.f32 %v525, %v549
        %v566 = vadd.f32 %v526, %v550
        %v567 = vadd.f32 %v527, %v551
        %v568 = vadd.f32 %v528, %v552
        %v569 = vadd.f32 %v529, %v553
        %v570 = vadd.f32 %v530, %v554
        %v571 = vadd.f32 %v531, %v555
        %v572 = vadd.f32 %v532, %v556
        %v573 = vadd.f32 %v533, %v557
        %v574 = vadd.f32 %v534, %v558
        %575 = vst [vmem:[%s304] sm:$0xff] %v559
        %576 = vst [vmem:[%s304 + $0x8] sm:$0xff] %v560
        %577 = vst [vmem:[%s304 + $0x10] sm:$0xff] %v561
        %578 = vst [vmem:[%s304 + $0x18] sm:$0xff] %v562
        %579 = vst [vmem:[%s304 + $0x20] sm:$0xff] %v563
        %580 = vst [vmem:[%s304 + $0x28] sm:$0xff] %v564
        %581 = vst [vmem:[%s304 + $0x30] sm:$0xff] %v565
        %582 = vst [vmem:[%s304 + $0x38] sm:$0xff] %v566
        %583 = vst [vmem:[%s304 + $0x40] sm:$0xff] %v567
        %584 = vst [vmem:[%s304 + $0x48] sm:$0xff] %v568
        %585 = vst [vmem:[%s304 + $0x50] sm:$0xff] %v569
        %586 = vst [vmem:[%s304 + $0x58] sm:$0xff] %v570
        %587 = vst [vmem:[%s304 + $0x60] sm:$0xff] %v571
        %588 = vst [vmem:[%s304 + $0x68] sm:$0xff] %v572
        %589 = vst [vmem:[%s304 + $0x70] sm:$0xff] %v573
        %590 = vst [vmem:[%s304 + $0x78] sm:$0xff] %v574
        %s591 = sand.u32 %s166, 1
        %s592 = scalar_lea.sflag [#allocation4], %s591
        %s593 = sand.u32 %s166, 1
        %s594 = smul.addr %s593, 128
        %s595 = scalar_lea.vmem [#allocation7], %s594
        // Predicated region
        $region49: #{tpu_custom_call.1} parent=39 // pred_check
          %p596 = pneg %p176
        $region50: #{tpu_custom_call.1} parent=39 // pred_check_branch
          %598 = sbr.rel (%p596) target = $region52
        $region51: #{tpu_custom_call.1} parent=39 // pred_region
          %s599 = smul.u32 2, %s30
          %s601 = ssub.s32 2048, 2048
          %602 = vsyncadd %s592, %s601
          %s603 = smul.addr %s29, 16
          %s604 = sadd.s32 %s599, %s603
          %s605 = smul.addr %s604, 128
          %s606 = scalar_lea.hbm %s5, %s605
          %s607 = sshll.u32 %s595, 4
          %s608 = int_to_ptr.vmem [resolvable:$true] %s607
          %613 = dma.vmem_to_hbm [thread:$0]  %s608, 2048, %s606, %s592, 256, 256, 16
        $region52: #{tpu_custom_call.1} parent=39 // pred_fallthru
          _
      $region40: #{tpu_custom_call.1} parent=5 // pred_fallthru
        _
      %p614 = scmp.le.s32.totalorder 2, %s20
      // Predicated region
      $region53: #{tpu_custom_call.1} parent=5 // pred_check
        %p615 = pneg %p614
      $region54: #{tpu_custom_call.1} parent=5 // pred_check_branch
        %617 = sbr.rel (%p615) target = $region56
      $region55: #{tpu_custom_call.1} parent=5 // pred_region
        %s618 = ssub.s32 %s20, 2
        // Predicated region
        $region57: #{tpu_custom_call.1} parent=55 // pred_check
          %p619 = pneg %p182
        $region58: #{tpu_custom_call.1} parent=55 // pred_check_branch
          %621 = sbr.rel (%p619) target = $region60
        $region59: #{tpu_custom_call.1} parent=55 // pred_region
          %s622 = sand.u32 %s167, 1
          %s623 = scalar_lea.sflag [#allocation4], %s622
          %s624 = sand.u32 %s167, 1
          %s625 = smul.addr %s624, 128
          %s626 = scalar_lea.vmem [#allocation7], %s625
          %627 = dma.done %s623, 2048
        $region60: #{tpu_custom_call.1} parent=55 // pred_fallthru
          _
      $region56: #{tpu_custom_call.1} parent=5 // pred_fallthru
        _
    $region6: #{tpu_custom_call.1} parent=1 // loop_footer
      %s24 = sadd.s32 1, %s20
    $region7: #{tpu_custom_call.1} parent=1 // loop_footer_branch
      %19 = sbr.rel target = $region3
    $region8: #{tpu_custom_call.1} parent=1 // loop_exit
      _
    %628 = vsyncpa [#allocation3], 1
    %s629 = scalar_lea.sflag [#allocation3], 1
    %630 = vsyncpa %s629, 1
    %631 = vsyncpa [#allocation6], 1
    %s632 = scalar_lea.sflag [#allocation6], 1
    %633 = vsyncpa %s632, 1
    %634 = vsyncpa [#allocation4], 1
    %s635 = scalar_lea.sflag [#allocation4], 1
    %636 = vsyncpa %s635, 1

</llo_original>
